<compile_context>
chip_gen: v7x
topology: tpu7x:2x2x1
jax: 0.10.0
libtpu: 0.0.40
codegen_flags: <defaults>
</compile_context>

<pallas_src>
import functools
from typing import Optional

import jax
import jax.numpy as jnp
from jax.experimental import pallas as pl
from jax.experimental.pallas import tpu as pltpu


def _multihead_loss_kernel(*refs, has_cls: bool, has_ang: bool,
                           w_cls: float, w_ang: float, batch_size: int):
    """One grid step: partial cross-entropy sums for a (TB, C) batch tile."""
    it = iter(refs)
    tgt_ref = next(it)
    cls_ref = next(it) if has_cls else None
    ang_ref = next(it) if has_ang else None
    cls_out = next(it) if has_cls else None
    ang_out = next(it) if has_ang else None
    total_out = next(it)
    cls_acc = next(it) if has_cls else None
    ang_acc = next(it) if has_ang else None

    step = pl.program_id(0)
    n_steps = pl.num_programs(0)
    tb = tgt_ref.shape[0]
    C = (cls_ref if has_cls else ang_ref).shape[1]

    @pl.when(step == 0)
    def _init():
        if has_cls:
            cls_acc[...] = jnp.zeros_like(cls_acc)
        if has_ang:
            ang_acc[...] = jnp.zeros_like(ang_acc)

    tgt = tgt_ref[...]                                        # (tb, 1) int32
    col = jax.lax.broadcasted_iota(jnp.int32, (tb, C), 1)     # class index per lane
    onehot = col == tgt                                       # shared by both heads

    # Mask rows that fall past the true batch size (only on a partial last tile).
    needs_mask = (batch_size % tb) != 0
    if needs_mask:
        row = jax.lax.broadcasted_iota(jnp.int32, (tb, 1), 0) + step * tb
        valid = row < batch_size

    def ce_partial_sum(logits_ref):
        x = logits_ref[...].astype(jnp.float32)               # compute in f32
        m = jnp.max(x, axis=1, keepdims=True)                 # (tb, 1)
        lse = m + jnp.log(jnp.sum(jnp.exp(x - m), axis=1, keepdims=True))
        tlogit = jnp.sum(jnp.where(onehot, x, 0.0), axis=1, keepdims=True)
        per_row = lse - tlogit                                 # (tb, 1)
        if needs_mask:
            per_row = jnp.where(valid, per_row, 0.0)           # padded rows -> 0
        return jnp.sum(per_row, axis=0, keepdims=True)         # (1, 1)

    if has_cls:
        cls_acc[...] += ce_partial_sum(cls_ref)
    if has_ang:
        ang_acc[...] += ce_partial_sum(ang_ref)

    @pl.when(step == n_steps - 1)
    def _finalize():
        inv_b = jnp.float32(1.0 / batch_size)
        total = jnp.zeros((1, 1), jnp.float32)
        if has_cls:
            cls_mean = cls_acc[...] * inv_b
            cls_out[...] = cls_mean
            total = total + cls_mean * jnp.float32(w_cls)
        if has_ang:
            ang_mean = ang_acc[...] * inv_b
            ang_out[...] = ang_mean
            total = total + ang_mean * jnp.float32(w_ang)
        total_out[...] = total


def _choose_batch_tile(batch: int, n_cols: int, itemsize: int, n_heads: int,
                       budget_bytes: int = 12 * 1024 * 1024) -> int:
    """Largest sublane-aligned batch tile whose double-buffered working set
    (n_heads logits inputs x 2 pipeline buffers) stays under `budget_bytes`."""
    per_row_bytes = max(1, n_heads) * n_cols * itemsize
    tb = budget_bytes // (2 * per_row_bytes)
    tb = int(max(8, min(tb, batch, 2048)))
    if tb >= batch:
        return batch                       # single full-batch tile
    return max(8, (tb // 8) * 8)           # sublane-aligned partial tiles


def multihead_loss(cls_logits: Optional[jnp.ndarray],
                   angular_logits: Optional[jnp.ndarray],
                   target: jnp.ndarray,
                   *,
                   n_classes: int,
                   use_side_labels: bool,
                   weights: dict,
                   is_front: Optional[jnp.ndarray] = None,
                   batch_tile: Optional[int] = None):
    """Replicates MultiHeadLoss.forward.

    Returns dict(cls=..., arcface=..., total=...) matching MultiheadLossType.
    cls / arcface are scalar f32 (or None if the corresponding weight is 0);
    total has shape (1,) like the torch version.
    """
    if not use_side_labels:
        is_front = None

    w_cls = float(weights["cls"])
    w_ang = float(weights["angular"])
    has_cls = w_cls > 0
    has_ang = w_ang > 0

    if not has_cls and not has_ang:
        return {"cls": None, "arcface": None,
                "total": jnp.zeros((1,), jnp.float32)}

    if has_ang:
        assert angular_logits is not None, "Angular logits must be provided."

    tgt = target.astype(jnp.int32)
    if is_front is not None:
        # target[~is_front] += n_classes
        tgt = jnp.where(is_front.astype(jnp.bool_), tgt, tgt + n_classes)

    ref_logits = cls_logits if has_cls else angular_logits
    B, C = ref_logits.shape
    tgt2d = tgt.reshape(B, 1)

    itemsize = jnp.dtype(ref_logits.dtype).itemsize
    n_heads = int(has_cls) + int(has_ang)
    TB = batch_tile if batch_tile is not None else _choose_batch_tile(B, C, itemsize, n_heads)
    n_tiles = pl.cdiv(B, TB)

    kernel = functools.partial(
        _multihead_loss_kernel,
        has_cls=has_cls, has_ang=has_ang,
        w_cls=w_cls, w_ang=w_ang, batch_size=B)

    # Inputs: target tile + only the logits heads that are actually live.
    in_specs = [pl.BlockSpec((TB, 1), lambda i: (i, 0))]
    inputs = [tgt2d]
    if has_cls:
        in_specs.append(pl.BlockSpec((TB, C), lambda i: (i, 0)))
        inputs.append(cls_logits)
    if has_ang:
        in_specs.append(pl.BlockSpec((TB, C), lambda i: (i, 0)))
        inputs.append(angular_logits)

    scalar_shape = jax.ShapeDtypeStruct((1, 1), jnp.float32)
    scalar_spec = pl.BlockSpec((1, 1), lambda i: (0, 0))
    out_shapes, out_specs, scratch_shapes = [], [], []
    if has_cls:
        out_shapes.append(scalar_shape)
        out_specs.append(scalar_spec)
        scratch_shapes.append(pltpu.VMEM((1, 1), jnp.float32))
    if has_ang:
        out_shapes.append(scalar_shape)
        out_specs.append(scalar_spec)
        scratch_shapes.append(pltpu.VMEM((1, 1), jnp.float32))
    out_shapes.append(scalar_shape)      # weighted total
    out_specs.append(scalar_spec)

    bytes_accessed = n_heads * B * C * itemsize + B * 4 + (n_heads + 1) * 4
    cost = pl.CostEstimate(
        flops=int(5 * n_heads * B * C),
        transcendentals=int(n_heads * B * (C + 1)),
        bytes_accessed=int(bytes_accessed))

    outs = pl.pallas_call(
        kernel,
        out_shape=tuple(out_shapes),
        grid=(n_tiles,),
        in_specs=in_specs,
        out_specs=tuple(out_specs),
        scratch_shapes=tuple(scratch_shapes),
        compiler_params=pltpu.CompilerParams(
            dimension_semantics=("arbitrary",),      # reduction axis w/ accumulator
            vmem_limit_bytes=32 * 1024 * 1024),
        cost_estimate=cost,
    )(*inputs)

    outs = list(outs)
    idx = 0
    cls_out = None
    ang_out = None
    if has_cls:
        cls_out = outs[idx][0, 0]
        idx += 1
    if has_ang:
        ang_out = outs[idx][0, 0]
        idx += 1
    total_out = outs[idx].reshape(1)
    return {"cls": cls_out, "arcface": ang_out, "total": total_out}


def _reference(cls_logits, angular_logits, target, *, n_classes, use_side_labels,
               weights, is_front=None):
    """Pure-JAX reference for validation."""
    if not use_side_labels:
        is_front = None
    tgt = target.astype(jnp.int32)
    if is_front is not None:
        tgt = jnp.where(is_front.astype(jnp.bool_), tgt, tgt + n_classes)

    def ce(logits):
        lp = jax.nn.log_softmax(logits.astype(jnp.float32), axis=-1)
        return -jnp.mean(jnp.take_along_axis(lp, tgt[:, None], axis=1))

    cls_l = ce(cls_logits) if weights["cls"] > 0 else None
    ang_l = ce(angular_logits) if weights["angular"] > 0 else None
    total = jnp.zeros((), jnp.float32)
    if cls_l is not None:
        total = total + cls_l * weights["cls"]
    if ang_l is not None:
        total = total + ang_l * weights["angular"]
    return cls_l, ang_l, total


if __name__ == "__main__":
    key = jax.random.PRNGKey(0)
    n_classes = 16
    C = 2 * n_classes            # class dim doubled for front/back side labels

    # --- Test 1: both heads, full batch in one tile -------------------------
    B = 8
    weights = {"cls": 1.0, "angular": 0.5}
    k1, k2, k3, k4 = jax.random.split(key, 4)
    cls_logits = jax.random.normal(k1, (B, C), dtype=jnp.float32)
    angular_logits = jax.random.normal(k2, (B, C), dtype=jnp.float32)
    target = jax.random.randint(k3, (B,), 0, n_classes, dtype=jnp.int32)
    is_front = jax.random.bernoulli(k4, 0.5, (B,))

    out = multihead_loss(cls_logits, angular_logits, target,
                         n_classes=n_classes, use_side_labels=True,
                         weights=weights, is_front=is_front)
    jax.block_until_ready(out["total"])
    r_cls, r_ang, r_tot = _reference(cls_logits, angular_logits, target,
                                     n_classes=n_classes, use_side_labels=True,
                                     weights=weights, is_front=is_front)
    assert jnp.allclose(out["cls"], r_cls, atol=1e-5, rtol=1e-5)
    assert jnp.allclose(out["arcface"], r_ang, atol=1e-5, rtol=1e-5)
    assert jnp.allclose(out["total"][0], r_tot, atol=1e-5, rtol=1e-5)

    # --- Test 2: multi-tile batch with a partial last tile (masking path) ---
    B2 = 20
    weights2 = {"cls": 0.7, "angular": 1.3}
    k5, k6, k7, k8 = jax.random.split(jax.random.PRNGKey(1), 4)
    cls_logits2 = jax.random.normal(k5, (B2, C), dtype=jnp.float32)
    angular_logits2 = jax.random.normal(k6, (B2, C), dtype=jnp.float32)
    target2 = jax.random.randint(k7, (B2,), 0, n_classes, dtype=jnp.int32)
    is_front2 = jax.random.bernoulli(k8, 0.5, (B2,))

    out2 = multihead_loss(cls_logits2, angular_logits2, target2,
                          n_classes=n_classes, use_side_labels=True,
                          weights=weights2, is_front=is_front2,
                          batch_tile=8)           # force 3 tiles, last partial
    jax.block_until_ready(out2["total"])
    r2_cls, r2_ang, r2_tot = _reference(cls_logits2, angular_logits2, target2,
                                        n_classes=n_classes, use_side_labels=True,
                                        weights=weights2, is_front=is_front2)
    assert jnp.allclose(out2["cls"], r2_cls, atol=1e-5, rtol=1e-5)
    assert jnp.allclose(out2["arcface"], r2_ang, atol=1e-5, rtol=1e-5)
    assert jnp.allclose(out2["total"][0], r2_tot, atol=1e-5, rtol=1e-5)

    # --- Test 3: angular head disabled (statically skipped), no side labels -
    weights3 = {"cls": 1.0, "angular": 0.0}
    k9, k10 = jax.random.split(jax.random.PRNGKey(2), 2)
    cls_logits3 = jax.random.normal(k9, (B, n_classes), dtype=jnp.float32)
    target3 = jax.random.randint(k10, (B,), 0, n_classes, dtype=jnp.int32)

    out3 = multihead_loss(cls_logits3, None, target3,
                          n_classes=n_classes, use_side_labels=False,
                          weights=weights3)
    jax.block_until_ready(out3["total"])
    r3_cls, r3_ang, r3_tot = _reference(cls_logits3, None, target3,
                                        n_classes=n_classes, use_side_labels=False,
                                        weights=weights3)
    assert out3["arcface"] is None and r3_ang is None
    assert jnp.allclose(out3["cls"], r3_cls, atol=1e-5, rtol=1e-5)
    assert jnp.allclose(out3["total"][0], r3_tot, atol=1e-5, rtol=1e-5)

    print("KERNEL_OK")
</pallas_src>

<mosaic_0001>
module attributes {stable_mosaic.version = 11 : i64} {
  func.func @_multihead_loss_kernel(%arg0: i32, %arg1: memref<8x1xi32, #tpu.memory_space<vmem>>, %arg2: memref<8x32xf32, #tpu.memory_space<vmem>>, %arg3: memref<8x32xf32, #tpu.memory_space<vmem>>, %arg4: memref<1x1xf32, #tpu.memory_space<vmem>>, %arg5: memref<1x1xf32, #tpu.memory_space<vmem>>, %arg6: memref<1x1xf32, #tpu.memory_space<vmem>>, %arg7: memref<1x1xf32, #tpu.memory_space<vmem>>, %arg8: memref<1x1xf32, #tpu.memory_space<vmem>>) attributes {dimension_semantics = [#tpu.dimension_semantics<arbitrary>], iteration_bounds = array<i64: 1>, scalar_prefetch = 0 : i64, scratch_operands = 2 : i64, tpu.core_type = #tpu.core_type<tc>, window_params = [{transform_indices = @transform_0, window_bounds = array<i64: 8, 1>}, {transform_indices = @transform_1, window_bounds = array<i64: 8, 32>}, {transform_indices = @transform_2, window_bounds = array<i64: 8, 32>}, {pipeline_mode = #tpu.pipeline_mode<synchronous>, transform_indices = @transform_3, window_bounds = array<i64: 1, 1>}, {pipeline_mode = #tpu.pipeline_mode<synchronous>, transform_indices = @transform_4, window_bounds = array<i64: 1, 1>}, {pipeline_mode = #tpu.pipeline_mode<synchronous>, transform_indices = @transform_5, window_bounds = array<i64: 1, 1>}]} {
    %c0_i32 = arith.constant 0 : i32
    %0 = arith.cmpi eq, %arg0, %c0_i32 : i32
    %1 = arith.extui %0 : i1 to i32
    %c0_i32_0 = arith.constant 0 : i32
    %2 = arith.cmpi ne, %1, %c0_i32_0 : i32
    scf.if %2 {
      %cst_25 = arith.constant 0.000000e+00 : f32
      %50 = vector.broadcast %cst_25 : f32 to vector<1x1xf32>
      %c0_26 = arith.constant 0 : index
      %c0_27 = arith.constant 0 : index
      %51 = vector.load %arg7[%c0_26, %c0_27] : memref<1x1xf32, #tpu.memory_space<vmem>>, vector<1x1xf32>
      tpu.vector_store %arg7[%c0_26, %c0_27], %50 {strides = array<i32>} : memref<1x1xf32, #tpu.memory_space<vmem>>, vector<1x1xf32>,
      %cst_28 = arith.constant 0.000000e+00 : f32
      %52 = vector.broadcast %cst_28 : f32 to vector<1x1xf32>
      %c0_29 = arith.constant 0 : index
      %c0_30 = arith.constant 0 : index
      %53 = vector.load %arg8[%c0_29, %c0_30] : memref<1x1xf32, #tpu.memory_space<vmem>>, vector<1x1xf32>
      tpu.vector_store %arg8[%c0_29, %c0_30], %52 {strides = array<i32>} : memref<1x1xf32, #tpu.memory_space<vmem>>, vector<1x1xf32>,
    } else {
    }
    %c0 = arith.constant 0 : index
    %c0_1 = arith.constant 0 : index
    %3 = vector.load %arg1[%c0, %c0_1] : memref<8x1xi32, #tpu.memory_space<vmem>>, vector<8x1xi32>
    %4 = tpu.iota {dimensions = array<i32: 1>} : vector<8x32xi32>
    %5 = vector.broadcast %3 : vector<8x1xi32> to vector<8x32xi32>
    %6 = arith.cmpi eq, %4, %5 : vector<8x32xi32>
    %c0_2 = arith.constant 0 : index
    %c0_3 = arith.constant 0 : index
    %7 = vector.load %arg7[%c0_2, %c0_3] : memref<1x1xf32, #tpu.memory_space<vmem>>, vector<1x1xf32>
    %c0_4 = arith.constant 0 : index
    %c0_5 = arith.constant 0 : index
    %8 = vector.load %arg2[%c0_4, %c0_5] : memref<8x32xf32, #tpu.memory_space<vmem>>, vector<8x32xf32>
    %cst = arith.constant dense<0xFF800000> : vector<8xf32>
    %9 = vector.multi_reduction <maximumf>, %8, %cst [1] : vector<8x32xf32> to vector<8xf32>
    %10 = vector.shape_cast %9 : vector<8xf32> to vector<8x1xf32>
    %11 = vector.broadcast %10 : vector<8x1xf32> to vector<8x32xf32>
    %12 = arith.subf %8, %11 : vector<8x32xf32>
    %13 = math.exp %12 : vector<8x32xf32>
    %cst_6 = arith.constant dense<0.000000e+00> : vector<8xf32>
    %14 = vector.multi_reduction <add>, %13, %cst_6 [1] : vector<8x32xf32> to vector<8xf32>
    %15 = vector.shape_cast %14 : vector<8xf32> to vector<8x1xf32>
    %16 = math.log %15 : vector<8x1xf32>
    %17 = arith.addf %10, %16 : vector<8x1xf32>
    %cst_7 = arith.constant 0.000000e+00 : f32
    %18 = vector.broadcast %cst_7 : f32 to vector<8x32xf32>
    %19 = arith.select %6, %8, %18 : vector<8x32xi1>, vector<8x32xf32>
    %cst_8 = arith.constant dense<0.000000e+00> : vector<8xf32>
    %20 = vector.multi_reduction <add>, %19, %cst_8 [1] : vector<8x32xf32> to vector<8xf32>
    %21 = vector.shape_cast %20 : vector<8xf32> to vector<8x1xf32>
    %22 = arith.subf %17, %21 : vector<8x1xf32>
    %cst_9 = arith.constant dense<0.000000e+00> : vector<1xf32>
    %23 = vector.multi_reduction <add>, %22, %cst_9 [0] : vector<8x1xf32> to vector<1xf32>
    %24 = vector.shape_cast %23 : vector<1xf32> to vector<1x1xf32>
    %25 = arith.addf %7, %24 : vector<1x1xf32>
    %c0_10 = arith.constant 0 : index
    %c0_11 = arith.constant 0 : index
    %26 = vector.load %arg7[%c0_10, %c0_11] : memref<1x1xf32, #tpu.memory_space<vmem>>, vector<1x1xf32>
    tpu.vector_store %arg7[%c0_10, %c0_11], %25 {strides = array<i32>} : memref<1x1xf32, #tpu.memory_space<vmem>>, vector<1x1xf32>,
    %c0_12 = arith.constant 0 : index
    %c0_13 = arith.constant 0 : index
    %27 = vector.load %arg8[%c0_12, %c0_13] : memref<1x1xf32, #tpu.memory_space<vmem>>, vector<1x1xf32>
    %c0_14 = arith.constant 0 : index
    %c0_15 = arith.constant 0 : index
    %28 = vector.load %arg3[%c0_14, %c0_15] : memref<8x32xf32, #tpu.memory_space<vmem>>, vector<8x32xf32>
    %cst_16 = arith.constant dense<0xFF800000> : vector<8xf32>
    %29 = vector.multi_reduction <maximumf>, %28, %cst_16 [1] : vector<8x32xf32> to vector<8xf32>
    %30 = vector.shape_cast %29 : vector<8xf32> to vector<8x1xf32>
    %31 = vector.broadcast %30 : vector<8x1xf32> to vector<8x32xf32>
    %32 = arith.subf %28, %31 : vector<8x32xf32>
    %33 = math.exp %32 : vector<8x32xf32>
    %cst_17 = arith.constant dense<0.000000e+00> : vector<8xf32>
    %34 = vector.multi_reduction <add>, %33, %cst_17 [1] : vector<8x32xf32> to vector<8xf32>
    %35 = vector.shape_cast %34 : vector<8xf32> to vector<8x1xf32>
    %36 = math.log %35 : vector<8x1xf32>
    %37 = arith.addf %30, %36 : vector<8x1xf32>
    %cst_18 = arith.constant 0.000000e+00 : f32
    %38 = vector.broadcast %cst_18 : f32 to vector<8x32xf32>
    %39 = arith.select %6, %28, %38 : vector<8x32xi1>, vector<8x32xf32>
    %cst_19 = arith.constant dense<0.000000e+00> : vector<8xf32>
    %40 = vector.multi_reduction <add>, %39, %cst_19 [1] : vector<8x32xf32> to vector<8xf32>
    %41 = vector.shape_cast %40 : vector<8xf32> to vector<8x1xf32>
    %42 = arith.subf %37, %41 : vector<8x1xf32>
    %cst_20 = arith.constant dense<0.000000e+00> : vector<1xf32>
    %43 = vector.multi_reduction <add>, %42, %cst_20 [0] : vector<8x1xf32> to vector<1xf32>
    %44 = vector.shape_cast %43 : vector<1xf32> to vector<1x1xf32>
    %45 = arith.addf %27, %44 : vector<1x1xf32>
    %c0_21 = arith.constant 0 : index
    %c0_22 = arith.constant 0 : index
    %46 = vector.load %arg8[%c0_21, %c0_22] : memref<1x1xf32, #tpu.memory_space<vmem>>, vector<1x1xf32>
    tpu.vector_store %arg8[%c0_21, %c0_22], %45 {strides = array<i32>} : memref<1x1xf32, #tpu.memory_space<vmem>>, vector<1x1xf32>,
    %c0_i32_23 = arith.constant 0 : i32
    %47 = arith.cmpi eq, %arg0, %c0_i32_23 : i32
    %48 = arith.extui %47 : i1 to i32
    %c0_i32_24 = arith.constant 0 : i32
    %49 = arith.cmpi ne, %48, %c0_i32_24 : i32
    scf.if %49 {
      %cst_25 = arith.constant 0.000000e+00 : f32
      %50 = vector.broadcast %cst_25 : f32 to vector<1x1xf32>
      %c0_26 = arith.constant 0 : index
      %c0_27 = arith.constant 0 : index
      %51 = vector.load %arg7[%c0_26, %c0_27] : memref<1x1xf32, #tpu.memory_space<vmem>>, vector<1x1xf32>
      %cst_28 = arith.constant 1.250000e-01 : f32
      %52 = vector.broadcast %cst_28 : f32 to vector<1x1xf32>
      %53 = arith.mulf %51, %52 : vector<1x1xf32>
      %c0_29 = arith.constant 0 : index
      %c0_30 = arith.constant 0 : index
      %54 = vector.load %arg4[%c0_29, %c0_30] : memref<1x1xf32, #tpu.memory_space<vmem>>, vector<1x1xf32>
      tpu.vector_store %arg4[%c0_29, %c0_30], %53 {strides = array<i32>} : memref<1x1xf32, #tpu.memory_space<vmem>>, vector<1x1xf32>,
      %cst_31 = arith.constant 1.000000e+00 : f32
      %55 = vector.broadcast %cst_31 : f32 to vector<1x1xf32>
      %56 = arith.mulf %53, %55 : vector<1x1xf32>
      %57 = arith.addf %50, %56 : vector<1x1xf32>
      %c0_32 = arith.constant 0 : index
      %c0_33 = arith.constant 0 : index
      %58 = vector.load %arg8[%c0_32, %c0_33] : memref<1x1xf32, #tpu.memory_space<vmem>>, vector<1x1xf32>
      %cst_34 = arith.constant 1.250000e-01 : f32
      %59 = vector.broadcast %cst_34 : f32 to vector<1x1xf32>
      %60 = arith.mulf %58, %59 : vector<1x1xf32>
      %c0_35 = arith.constant 0 : index
      %c0_36 = arith.constant 0 : index
      %61 = vector.load %arg5[%c0_35, %c0_36] : memref<1x1xf32, #tpu.memory_space<vmem>>, vector<1x1xf32>
      tpu.vector_store %arg5[%c0_35, %c0_36], %60 {strides = array<i32>} : memref<1x1xf32, #tpu.memory_space<vmem>>, vector<1x1xf32>,
      %cst_37 = arith.constant 5.000000e-01 : f32
      %62 = vector.broadcast %cst_37 : f32 to vector<1x1xf32>
      %63 = arith.mulf %60, %62 : vector<1x1xf32>
      %64 = arith.addf %57, %63 : vector<1x1xf32>
      %c0_38 = arith.constant 0 : index
      %c0_39 = arith.constant 0 : index
      %65 = vector.load %arg6[%c0_38, %c0_39] : memref<1x1xf32, #tpu.memory_space<vmem>>, vector<1x1xf32>
      tpu.vector_store %arg6[%c0_38, %c0_39], %64 {strides = array<i32>} : memref<1x1xf32, #tpu.memory_space<vmem>>, vector<1x1xf32>,
    } else {
    }
    return
  }
  func.func @transform_0(%arg0: i32) -> (i32, i32) {
    %c0_i32 = arith.constant 0 : i32
    %c0_i32_0 = arith.constant 0 : i32
    return %arg0, %c0_i32 : i32, i32
  }
  func.func @transform_1(%arg0: i32) -> (i32, i32) {
    %c0_i32 = arith.constant 0 : i32
    %c0_i32_0 = arith.constant 0 : i32
    return %arg0, %c0_i32 : i32, i32
  }
  func.func @transform_2(%arg0: i32) -> (i32, i32) {
    %c0_i32 = arith.constant 0 : i32
    %c0_i32_0 = arith.constant 0 : i32
    return %arg0, %c0_i32 : i32, i32
  }
  func.func @transform_3(%arg0: i32) -> (i32, i32) {
    %c0_i32 = arith.constant 0 : i32
    %c0_i32_0 = arith.constant 0 : i32
    %c0_i32_1 = arith.constant 0 : i32
    return %c0_i32, %c0_i32_0 : i32, i32
  }
  func.func @transform_4(%arg0: i32) -> (i32, i32) {
    %c0_i32 = arith.constant 0 : i32
    %c0_i32_0 = arith.constant 0 : i32
    %c0_i32_1 = arith.constant 0 : i32
    return %c0_i32, %c0_i32_0 : i32, i32
  }
  func.func @transform_5(%arg0: i32) -> (i32, i32) {
    %c0_i32 = arith.constant 0 : i32
    %c0_i32_0 = arith.constant 0 : i32
    %c0_i32_1 = arith.constant 0 : i32
    return %c0_i32, %c0_i32_0 : i32, i32
  }
}

</mosaic_0001>

<llo_original>
// kernel: tpu_custom_call.1
$region0: #{tpu_custom_call.1}
  #allocation0 [shape = 'u32[]', space=smem, size = 0x4, offset = 0x4, fixed_abs, tag = 'smem constant byte address 0x4 - core index']
  #allocation1 [shape = 'u32[144,128]{1,0:T(1,128)}', space=vmem, size = 0x12000, scoped, tag = 'internal scratch']
  #allocation2 [shape = 'f32[1,1]{1,0:T(1,128)}', space=vmem, size = 0x200, scoped, tag = 'scratch operand']
  #allocation3 [shape = 'f32[1,1]{1,0:T(1,128)}', space=vmem, size = 0x200, scoped, tag = 'scratch operand']
  %s0 = inlined_call_operand.vmem [shape: s32[8,1], index: 0, kind: input, shape index: {}]
  %s1 = inlined_call_operand.vmem [shape: f32[8,32], index: 1, kind: input, shape index: {}]
  %s2 = inlined_call_operand.vmem [shape: f32[8,32], index: 2, kind: input, shape index: {}]
  %s3 = inlined_call_operand.hbm [shape: f32[1,1], index: 3, kind: output, shape index: {0}]
  %s4 = inlined_call_operand.hbm [shape: f32[1,1], index: 4, kind: output, shape index: {1}]
  %s5 = inlined_call_operand.hbm [shape: f32[1,1], index: 5, kind: output, shape index: {2}]
  %6 = xla_tuple %s3, %s4, %s5
  %s7 = sld [smem:[#allocation0]]
  $region46: #{tpu_custom_call.1} parent=0
    _
  %s9 = ssub.s32 1, %s7
  %s10 = scalar_select 0, %s9, %s7
  $region1: #{tpu_custom_call.1} parent=0
    #allocation4 [shape = 'u8[512]{0}', space=vmem, size = 0x400, scoped, tag = 'output window, operand 0, single buffered']
    #allocation5 [shape = 's32[1]{0}', space=sflag, size = 0x4, scoped, tag = 'scoped memory for tpu_custom_call.1']
    #allocation6 [shape = 'u8[512]{0}', space=vmem, size = 0x400, scoped, tag = 'output window, operand 1, single buffered']
    #allocation7 [shape = 's32[1]{0}', space=sflag, size = 0x4, scoped, tag = 'scoped memory for tpu_custom_call.1']
    #allocation8 [shape = 'u8[512]{0}', space=vmem, size = 0x400, scoped, tag = 'output window, operand 2, single buffered']
    %11 = vsyncpa [#allocation5], 0
    %12 = vsyncpa [#allocation7], 0
    // Predicated region
    $region2: #{tpu_custom_call.1} parent=1 // pred_check
      _
    $region3: #{tpu_custom_call.1} parent=1 // pred_check_branch
      %14 = sbr.rel (0) target = $region5
    $region4: #{tpu_custom_call.1} parent=1 // pred_region
      _
    $region5: #{tpu_custom_call.1} parent=1 // pred_fallthru
      _
    // Predicated region
    $region6: #{tpu_custom_call.1} parent=1 // pred_check
      _
    $region7: #{tpu_custom_call.1} parent=1 // pred_check_branch
      %16 = sbr.rel (0) target = $region9
    $region8: #{tpu_custom_call.1} parent=1 // pred_region
      _
    $region9: #{tpu_custom_call.1} parent=1 // pred_fallthru
      _
    // Predicated region
    $region10: #{tpu_custom_call.1} parent=1 // pred_check
      _
    $region11: #{tpu_custom_call.1} parent=1 // pred_check_branch
      %18 = sbr.rel (0) target = $region13
    $region12: #{tpu_custom_call.1} parent=1 // pred_region
      _
    $region13: #{tpu_custom_call.1} parent=1 // pred_fallthru
      _
    %p19 = scmp.eq.s32.totalorder 0, 0
    // Predicated region
    $region14: #{tpu_custom_call.1} parent=1 // pred_check
      %p20 = pneg %p19
    $region15: #{tpu_custom_call.1} parent=1 // pred_check_branch
      %22 = sbr.rel (%p20) target = $region17
    $region16: #{tpu_custom_call.1} parent=1 // pred_region
      %vm23 = vcmask 0
      %24 = vst.msk [vmem:[#allocation2] sm:$0x1] %vm23, 0.0
      %25 = vst.msk [vmem:[#allocation3] sm:$0x1] %vm23, 0.0
    $region17: #{tpu_custom_call.1} parent=1 // pred_fallthru
      _
    %v26 = vld [vmem:[%s0] sm:$0xff]
    %v27 = vlaneseq
    %v28 = vand.u32 %v27, 127
    %29 = vset.pattern.permute.xlu0 0
    %30 = vperm.xlu0 %29, %v26
    %v31 = vpop.permute.xlu0 %30
    %vm32 = vcmp.eq.s32.totalorder %v28, %v31
    %v33 = vld [vmem:[#allocation2] sm:$0x1]
    %v34 = vld [vmem:[%s1] sm:$0xff]
    %vm35 = vcmask 261120
    %v36 = vsel %vm35, %v34, -inf
    %37 = vmax.xlane.f32.xlu0 %v36
    %v38 = vpop.xlane.xlu0 %37
    %v39 = vsub.f32 %v34, %v38
    %v40 = vmul.f32 %v39, 1.442695
    %v41 = vpow.pop %v40
    %v42 = vsel %vm35, %v41, 0.0
    %43 = vadd.xlane.f32.xlu0 %v42
    %v44 = vpop.xlane.xlu0 %43
    %v45 = vlog2.pop %v44
    %v46 = vmul.f32 %v45, 0.6931472
    %v47 = vadd.f32 %v38, %v46
    %v48 = vsel %vm32, %v34, 0.0
    %v49 = vsel %vm35, %v48, 0.0
    %50 = vadd.xlane.f32.xlu0 %v49
    %v51 = vpop.xlane.xlu0 %50
    %v52 = vsub.f32 %v47, %v51
    %v53 = vrot.slane %v52, 4
    %v54 = vadd.f32 %v52, %v53
    %v55 = vrot.slane %v54, 2
    %v56 = vadd.f32 %v54, %v55
    %v57 = vrot.slane %v56, 1
    %v58 = vadd.f32 %v56, %v57
    %v59 = vadd.f32 %v33, %v58
    %vm60 = vcmask 0
    %61 = vst.msk [vmem:[#allocation2] sm:$0x1] %vm60, %v59
    %v62 = vld [vmem:[#allocation3] sm:$0x1]
    %v63 = vld [vmem:[%s2] sm:$0xff]
    %v64 = vsel %vm35, %v63, -inf
    %65 = vmax.xlane.f32.xlu0 %v64
    %v66 = vpop.xlane.xlu0 %65
    %v67 = vsub.f32 %v63, %v66
    %v68 = vmul.f32 %v67, 1.442695
    %v69 = vpow.pop %v68
    %v70 = vsel %vm35, %v69, 0.0
    %71 = vadd.xlane.f32.xlu0 %v70
    %v72 = vpop.xlane.xlu0 %71
    %v73 = vlog2.pop %v72
    %v74 = vmul.f32 %v73, 0.6931472
    %v75 = vadd.f32 %v66, %v74
    %v76 = vsel %vm32, %v63, 0.0
    %v77 = vsel %vm35, %v76, 0.0
    %78 = vadd.xlane.f32.xlu0 %v77
    %v79 = vpop.xlane.xlu0 %78
    %v80 = vsub.f32 %v75, %v79
    %v81 = vrot.slane %v80, 4
    %v82 = vadd.f32 %v80, %v81
    %v83 = vrot.slane %v82, 2
    %v84 = vadd.f32 %v82, %v83
    %v85 = vrot.slane %v84, 1
    %v86 = vadd.f32 %v84, %v85
    %v87 = vadd.f32 %v62, %v86
    %88 = vst.msk [vmem:[#allocation3] sm:$0x1] %vm60, %v87
    // Predicated region
    $region18: #{tpu_custom_call.1} parent=1 // pred_check
      %p89 = pneg %p19
    $region19: #{tpu_custom_call.1} parent=1 // pred_check_branch
      %91 = sbr.rel (%p89) target = $region21
    $region20: #{tpu_custom_call.1} parent=1 // pred_region
      %v92 = vld [vmem:[#allocation2] sm:$0x1]
      %v93 = vmul.f32 %v92, 0.125
      %94 = vst.msk [vmem:[#allocation4] sm:$0x1] %vm60, %v93
      %v95 = vadd.f32 %v93, 0.0
      %v96 = vld [vmem:[#allocation3] sm:$0x1]
      %v97 = vmul.f32 %v96, 0.125
      %98 = vst.msk [vmem:[#allocation6] sm:$0x1] %vm60, %v97
      %v99 = vmul.f32 %v97, 0.5
      %v100 = vadd.f32 %v95, %v99
      %101 = vst.msk [vmem:[#allocation8] sm:$0x1] %vm60, %v100
    $region21: #{tpu_custom_call.1} parent=1 // pred_fallthru
      _
    // Predicated region
    $region22: #{tpu_custom_call.1} parent=1 // pred_check
      _
    $region23: #{tpu_custom_call.1} parent=1 // pred_check_branch
      %103 = sbr.rel (0) target = $region25
    $region24: #{tpu_custom_call.1} parent=1 // pred_region
      %s105 = ssub.s32 16, 16
      %106 = vsyncadd [#allocation5], %s105
      %s108 = sshll.u32 [#allocation4], 4
      %s109 = int_to_ptr.vmem [resolvable:$true] %s108
      %111 = dma.vmem_to_hbm [thread:$0]  %s109, 16, %s3, [#allocation5]
    $region25: #{tpu_custom_call.1} parent=1 // pred_fallthru
      _
    // Predicated region
    $region26: #{tpu_custom_call.1} parent=1 // pred_check
      _
    $region27: #{tpu_custom_call.1} parent=1 // pred_check_branch
      %113 = sbr.rel (0) target = $region29
    $region28: #{tpu_custom_call.1} parent=1 // pred_region
      %s115 = ssub.s32 16, 16
      %116 = vsyncadd [#allocation7], %s115
      %s118 = sshll.u32 [#allocation6], 4
      %s119 = int_to_ptr.vmem [resolvable:$true] %s118
      %121 = dma.vmem_to_hbm [thread:$0]  %s119, 16, %s4, [#allocation7]
    $region29: #{tpu_custom_call.1} parent=1 // pred_fallthru
      _
    // Predicated region
    $region30: #{tpu_custom_call.1} parent=1 // pred_check
      _
    $region31: #{tpu_custom_call.1} parent=1 // pred_check_branch
      %123 = sbr.rel (0) target = $region33
    $region32: #{tpu_custom_call.1} parent=1 // pred_region
      %s125 = ssub.s32 16, 16
      %126 = vsyncadd [#allocation7], %s125
      %s128 = sshll.u32 [#allocation8], 4
      %s129 = int_to_ptr.vmem [resolvable:$true] %s128
      %131 = dma.vmem_to_hbm [thread:$0]  %s129, 16, %s5, [#allocation7]
    $region33: #{tpu_custom_call.1} parent=1 // pred_fallthru
      _
    // Predicated region
    $region34: #{tpu_custom_call.1} parent=1 // pred_check
      _
    $region35: #{tpu_custom_call.1} parent=1 // pred_check_branch
      %133 = sbr.rel (0) target = $region37
    $region36: #{tpu_custom_call.1} parent=1 // pred_region
      %134 = dma.done [#allocation5], 16
    $region37: #{tpu_custom_call.1} parent=1 // pred_fallthru
      _
    // Predicated region
    $region38: #{tpu_custom_call.1} parent=1 // pred_check
      _
    $region39: #{tpu_custom_call.1} parent=1 // pred_check_branch
      %136 = sbr.rel (0) target = $region41
    $region40: #{tpu_custom_call.1} parent=1 // pred_region
      %137 = dma.done [#allocation7], 16
    $region41: #{tpu_custom_call.1} parent=1 // pred_fallthru
      _
    // Predicated region
    $region42: #{tpu_custom_call.1} parent=1 // pred_check
      _
    $region43: #{tpu_custom_call.1} parent=1 // pred_check_branch
      %139 = sbr.rel (0) target = $region45
    $region44: #{tpu_custom_call.1} parent=1 // pred_region
      %140 = dma.done [#allocation7], 16
    $region45: #{tpu_custom_call.1} parent=1 // pred_fallthru
      _
    %141 = vsyncpa [#allocation5], 1
    %142 = vsyncpa [#allocation7], 1

</llo_original>
